<compile_context>
chip_gen: v7x
topology: tpu7x:2x2x1
jax: 0.10.0
libtpu: 0.0.40
codegen_flags: <defaults>
</compile_context>

<pallas_src>
import math

import jax
import jax.numpy as jnp
from jax.experimental import pallas as pl
from jax.experimental.pallas import tpu as pltpu

EPS = 1e-5  # PyTorch LayerNorm default eps


def _layernorm(x, eps=EPS):
    mu = jnp.mean(x, axis=-1, keepdims=True)
    var = jnp.mean((x - mu) ** 2, axis=-1, keepdims=True)
    return (x - mu) * jax.lax.rsqrt(var + eps)


# ---------------------------------------------------------------------------
# Fused kernel: grid = (B//Bb, n_layer); layer axis innermost ("arbitrary").
# Per layer step (eval mode, dropout = identity):
#   AdaLayerNorm (non-affine LN * (1+scale) + shift)   -> res1
#   channel-mix Linear over L + ReLU                   -> + res1 = res2
#   MLP: SiLU(Linear D->4D) -> Linear 4D->D            -> + res2
#   DecoderBlock.LayerNorm (affine), then the outer per-block LayerNorm.
# ---------------------------------------------------------------------------
def decoder_fused_kernel(x_ref, ss_ref, wcb_ref, w1t_ref, w2t_ref, vec_ref,
                         o_ref, acc_ref):
    layer = pl.program_id(1)
    Bb, L, D = acc_ref.shape
    H = w1t_ref.shape[-1]

    # Load x from HBM only at the first layer of each batch block.
    @pl.when(layer == 0)
    def _():
        acc_ref[...] = x_ref[...].astype(jnp.float32)

    x = acc_ref[...]                                   # (Bb, L, D) f32
    ss = ss_ref[0]                                     # (Bb, 2, D) f32: [scale, shift]
    vec = vec_ref[0]                                   # (6, H) f32 packed small vectors
    wcb = wcb_ref[0]                                   # (L, L+1) bf16: [Wc | bc]

    # --- AdaLayerNorm: LN (no affine) * (1 + scale) + shift ---
    x = _layernorm(x) * (1.0 + ss[:, 0:1, :]) + ss[:, 1:2, :]
    res1 = x

    # --- channel-mix Linear over L + ReLU ---
    # PyTorch: fc1(x.permute(0,2,1)).permute(0,2,1)  ==>  y[b,k,d] = sum_l Wc[k,l] x[b,l,d] + bc[k]
    wc = jnp.broadcast_to(wcb[:, :L], (Bb, L, L))      # bf16, shared across batch
    bc = wcb[:, L:L + 1].astype(jnp.float32)           # (L, 1) column bias
    y = jnp.einsum('bkl,bld->bkd', wc, x.astype(jnp.bfloat16),
                   preferred_element_type=jnp.float32)
    y = jnp.maximum(y + bc, 0.0)
    res2 = y + res1

    # --- MLP: SiLU(Linear D->4D) -> Linear 4D->D, big-M matmuls over (Bb*L, D) ---
    r2 = res2.reshape(Bb * L, D)
    h = jnp.dot(r2.astype(jnp.bfloat16), w1t_ref[0],
                preferred_element_type=jnp.float32) + vec[0:1, :]     # + b1
    h = h * jax.nn.sigmoid(h)                                         # SiLU (EUP)
    out = jnp.dot(h.astype(jnp.bfloat16), w2t_ref[0],
                  preferred_element_type=jnp.float32) + vec[1:2, :D]  # + b2
    x = out.reshape(Bb, L, D) + res2

    # --- DecoderBlock.LayerNorm (affine), then the outer per-block LayerNorm ---
    x = _layernorm(x) * vec[2:3, :D] + vec[3:4, :D]
    x = _layernorm(x) * vec[4:5, :D] + vec[5:6, :D]

    acc_ref[...] = x

    # Write to HBM only after the last layer.
    @pl.when(layer == pl.num_programs(1) - 1)
    def _():
        o_ref[...] = acc_ref[...].astype(o_ref.dtype)


def _largest_divisor_leq(n, cap):
    cap = max(1, min(n, cap))
    for d in range(cap, 0, -1):
        if n % d == 0:
            return d
    return 1


def _pick_batch_block(B, L, D):
    """Largest batch block that (a) keeps the f32 working set well inside VMEM
    on every TPU generation (v7x: 64 MiB) and (b) leaves >= 2 blocks on the
    leading 'parallel' axis (v7x megacore) when the batch allows it."""
    H = 4 * D
    per_b = L * (6 * D + H) * 4                  # live f32 intermediates per batch element
    budget = 16 * 1024 * 1024
    cap = max(1, budget // max(per_b, 1))
    target = min(B, cap)
    if B >= 4:
        target = min(target, B // 2)
    return _largest_divisor_leq(B, target)


def decoder_fused_call(x, ss, wcb, w1t, w2t, vec, *, batch_block=None):
    """x: (B,L,D) f32; ss: (n_layer,B,2,D) f32; wcb/w1t/w2t: bf16 stacked weights;
    vec: (n_layer,6,4D) f32 packed [b1, b2, ln_w, ln_b, ln2_w, ln2_b]."""
    B, L, D = x.shape
    n_layer = wcb.shape[0]
    H = w1t.shape[-1]
    NV = vec.shape[1]

    Bb = _pick_batch_block(B, L, D) if batch_block is None else batch_block
    assert B % Bb == 0, "batch_block must divide batch size"
    nb = B // Bb

    # Explicit scoped-VMEM budget (defaults are only 16/32 MiB): double-buffered
    # blocks + resident scratch + live intermediates, with headroom.
    blk = (2 * Bb * L * D * 4            # x + out blocks (f32)
           + Bb * 2 * D * 4              # scale/shift
           + L * (L + 1) * 2             # [Wc|bc] bf16
           + 2 * D * H * 2               # W1^T + W2^T bf16
           + NV * H * 4)                 # packed small vectors
    live = Bb * L * (6 * D + H) * 4      # acc scratch + body intermediates (f32)
    vmem_limit = int(min(96 * 2**20, max(2 * (2 * blk + live), 32 * 2**20)))

    return pl.pallas_call(
        decoder_fused_kernel,
        out_shape=jax.ShapeDtypeStruct((B, L, D), x.dtype),
        grid=(nb, n_layer),
        in_specs=[
            pl.BlockSpec((Bb, L, D), lambda b, l: (b, 0, 0)),        # x (read at layer 0)
            pl.BlockSpec((1, Bb, 2, D), lambda b, l: (l, b, 0, 0)),  # AdaLN scale/shift
            pl.BlockSpec((1, L, L + 1), lambda b, l: (l, 0, 0)),     # [Wc | bc]  bf16
            pl.BlockSpec((1, D, H), lambda b, l: (l, 0, 0)),         # W1^T       bf16
            pl.BlockSpec((1, H, D), lambda b, l: (l, 0, 0)),         # W2^T       bf16
            pl.BlockSpec((1, NV, H), lambda b, l: (l, 0, 0)),        # packed small vectors
        ],
        out_specs=pl.BlockSpec((Bb, L, D), lambda b, l: (b, 0, 0)),
        scratch_shapes=[pltpu.VMEM((Bb, L, D), jnp.float32)],        # resident activation
        compiler_params=pltpu.CompilerParams(
            dimension_semantics=("parallel", "arbitrary"),
            vmem_limit_bytes=vmem_limit),
    )(x, ss, wcb, w1t, w2t, vec)


# ---------------------------------------------------------------------------
# Plain-JAX glue (tiny time-embedding path + kernel-facing param packing).
# ---------------------------------------------------------------------------
def sinusoidal_pos_emb(t, dim):
    half = dim // 2
    denom = max(half - 1, 1)
    factor = math.log(10000.0) / denom
    freqs = jnp.exp(jnp.arange(half, dtype=jnp.float32) * -factor)
    emb = t[:, None].astype(jnp.float32) * freqs[None, :]
    return jnp.concatenate([jnp.sin(emb), jnp.cos(emb)], axis=-1)     # (B, dim)


def decoder_forward(enc, t, params, label_emb=None, batch_block=None):
    """Full Decoder.forward. enc: (B, L, D), t: (B,)."""
    B, L, D = enc.shape
    n_layer = params["ada_w"].shape[0]
    H = 4 * D

    emb = sinusoidal_pos_emb(t, D)
    if label_emb is not None:
        emb = emb + label_emb
    emb = emb * jax.nn.sigmoid(emb)                      # SiLU inside AdaLayerNorm

    # Hoisted AdaLN projection for ALL layers in one stacked matmul.
    ada_w = params["ada_w"].reshape(n_layer * 2 * D, D)
    ada_b = params["ada_b"].reshape(n_layer * 2 * D)
    ss = (emb @ ada_w.T + ada_b).reshape(B, n_layer, 2, D)
    ss = jnp.transpose(ss, (1, 0, 2, 3)).astype(jnp.float32)          # (n_layer, B, 2, D)

    # Kernel-facing packing (in practice precomputed once; trivial under jit).
    wcb = jnp.concatenate([params["wc"], params["bc"][:, :, None]], axis=-1)
    wcb = wcb.astype(jnp.bfloat16)                                    # (n_layer, L, L+1)
    w1t = jnp.transpose(params["w1"], (0, 2, 1)).astype(jnp.bfloat16) # (n_layer, D, H)
    w2t = jnp.transpose(params["w2"], (0, 2, 1)).astype(jnp.bfloat16) # (n_layer, H, D)

    def _pad(v):                                        # (n_layer, k) -> (n_layer, H)
        return jnp.pad(v, ((0, 0), (0, H - v.shape[-1])))
    vec = jnp.stack([params["b1"], _pad(params["b2"]),
                     _pad(params["ln_w"]), _pad(params["ln_b"]),
                     _pad(params["ln2_w"]), _pad(params["ln2_b"])],
                    axis=1).astype(jnp.float32)         # (n_layer, 6, H)

    return decoder_fused_call(enc, ss, wcb, w1t, w2t, vec, batch_block=batch_block)


# ---------------------------------------------------------------------------
# Pure-JAX reference (mirrors the PyTorch module, eval mode).  The big weights
# are passed through bf16 to match the kernel's deliberate precision policy.
# ---------------------------------------------------------------------------
def decoder_reference(enc, t, params, label_emb=None):
    B, L, D = enc.shape
    n_layer = params["ada_w"].shape[0]
    q = lambda w: w.astype(jnp.bfloat16).astype(jnp.float32)

    emb = sinusoidal_pos_emb(t, D)
    if label_emb is not None:
        emb = emb + label_emb
    emb = emb * jax.nn.sigmoid(emb)

    x = enc.astype(jnp.float32)
    for i in range(n_layer):
        ss = emb @ params["ada_w"][i].T + params["ada_b"][i]          # (B, 2D)
        scale, shift = ss[:, None, :D], ss[:, None, D:]
        xa = _layernorm(x) * (1.0 + scale) + shift
        res1 = xa
        y = jnp.einsum('kl,bld->bkd', q(params["wc"][i]), xa) \
            + q(params["bc"][i])[None, :, None]
        res2 = jnp.maximum(y, 0.0) + res1
        h = res2 @ q(params["w1"][i]).T + params["b1"][i]
        h = h * jax.nn.sigmoid(h)
        out = h @ q(params["w2"][i]).T + params["b2"][i]
        x2 = out + res2
        x2 = _layernorm(x2) * params["ln_w"][i] + params["ln_b"][i]
        x = _layernorm(x2) * params["ln2_w"][i] + params["ln2_b"][i]
    return x


# ---------------------------------------------------------------------------
# Parameter construction (PyTorch nn.Linear layout, stacked per layer).
# ---------------------------------------------------------------------------
def init_params(key, n_channel, emb_dim, n_layer):
    D, L, H = emb_dim, n_channel, 4 * emb_dim
    ks = jax.random.split(key, 12)
    s = 0.05
    n = lambda k, shape: jax.random.normal(k, shape, jnp.float32) * s
    return {
        # AdaLayerNorm.linear: weight (2D, D), bias (2D,)
        "ada_w": n(ks[0], (n_layer, 2 * D, D)),
        "ada_b": n(ks[1], (n_layer, 2 * D)),
        # LINEAR.fc1 over the channel (L) axis: weight (L, L), bias (L,)
        "wc": n(ks[2], (n_layer, L, L)),
        "bc": n(ks[3], (n_layer, L)),
        # MLP linears (PyTorch layout: weight (out, in))
        "w1": n(ks[4], (n_layer, H, D)),
        "b1": n(ks[5], (n_layer, H)),
        "w2": n(ks[6], (n_layer, D, H)),
        "b2": n(ks[7], (n_layer, D)),
        # DecoderBlock.LayerNorm (affine) and the outer per-block LayerNorm
        "ln_w": 1.0 + n(ks[8], (n_layer, D)),
        "ln_b": n(ks[9], (n_layer, D)),
        "ln2_w": 1.0 + n(ks[10], (n_layer, D)),
        "ln2_b": n(ks[11], (n_layer, D)),
    }


if __name__ == "__main__":
    # Small shapes consistent with the module: enc is (B, n_channel, emb_dim).
    B, n_channel, emb_dim, n_layer = 2, 8, 32, 3

    key = jax.random.PRNGKey(0)
    k_x, k_t, k_p = jax.random.split(key, 3)

    enc = jax.random.normal(k_x, (B, n_channel, emb_dim), jnp.float32)
    t = jax.random.randint(k_t, (B,), 0, 100).astype(jnp.float32)
    params = init_params(k_p, n_channel, emb_dim, n_layer)

    out = jax.jit(decoder_forward)(enc, t, params)
    out = jax.block_until_ready(out)
    assert out.shape == (B, n_channel, emb_dim)
    assert bool(jnp.all(jnp.isfinite(out)))

    # Correctness check against the pure-JAX reference (same bf16 weight policy;
    # tolerance absorbs LHS bf16 rounding / MXU pass differences).
    ref = decoder_reference(enc, t, params)
    err = float(jnp.max(jnp.abs(out - ref)))
    assert bool(jnp.allclose(out, ref, rtol=2e-2, atol=2e-2)), f"max abs err {err}"

    print("KERNEL_OK")
</pallas_src>

<mosaic_0001>
module attributes {stable_mosaic.version = 11 : i64} {
  func.func @decoder_fused_kernel(%arg0: i32, %arg1: i32, %arg2: memref<2x8x32xf32, #tpu.memory_space<vmem>>, %arg3: memref<1x2x2x32xf32, #tpu.memory_space<vmem>>, %arg4: memref<1x8x9xbf16, #tpu.memory_space<vmem>>, %arg5: memref<1x32x128xbf16, #tpu.memory_space<vmem>>, %arg6: memref<1x128x32xbf16, #tpu.memory_space<vmem>>, %arg7: memref<1x6x128xf32, #tpu.memory_space<vmem>>, %arg8: memref<2x8x32xf32, #tpu.memory_space<vmem>>, %arg9: memref<2x8x32xf32, #tpu.memory_space<vmem>>) attributes {dimension_semantics = [#tpu.dimension_semantics<parallel>, #tpu.dimension_semantics<arbitrary>], iteration_bounds = array<i64: 1, 3>, scalar_prefetch = 0 : i64, scratch_operands = 1 : i64, tpu.core_type = #tpu.core_type<tc>, window_params = [{transform_indices = @transform_0, window_bounds = array<i64: 2, 8, 32>}, {transform_indices = @transform_1, window_bounds = array<i64: 1, 2, 2, 32>}, {transform_indices = @transform_2, window_bounds = array<i64: 1, 8, 9>}, {transform_indices = @transform_3, window_bounds = array<i64: 1, 32, 128>}, {transform_indices = @transform_4, window_bounds = array<i64: 1, 128, 32>}, {transform_indices = @transform_5, window_bounds = array<i64: 1, 6, 128>}, {transform_indices = @transform_6, window_bounds = array<i64: 2, 8, 32>}]} {
    %c0_i32 = arith.constant 0 : i32
    %0 = arith.cmpi eq, %arg1, %c0_i32 : i32
    %1 = arith.extui %0 : i1 to i32
    %c0_i32_0 = arith.constant 0 : i32
    %2 = arith.cmpi ne, %1, %c0_i32_0 : i32
    scf.if %2 {
      %c0_43 = arith.constant 0 : index
      %c0_44 = arith.constant 0 : index
      %c0_45 = arith.constant 0 : index
      %128 = vector.load %arg2[%c0_43, %c0_44, %c0_45] : memref<2x8x32xf32, #tpu.memory_space<vmem>>, vector<2x8x32xf32>
      %c0_46 = arith.constant 0 : index
      %c0_47 = arith.constant 0 : index
      %c0_48 = arith.constant 0 : index
      %129 = vector.load %arg9[%c0_46, %c0_47, %c0_48] : memref<2x8x32xf32, #tpu.memory_space<vmem>>, vector<2x8x32xf32>
      tpu.vector_store %arg9[%c0_46, %c0_47, %c0_48], %128 {strides = array<i32>} : memref<2x8x32xf32, #tpu.memory_space<vmem>>, vector<2x8x32xf32>,
    } else {
    }
    %c0 = arith.constant 0 : index
    %c0_1 = arith.constant 0 : index
    %c0_2 = arith.constant 0 : index
    %3 = vector.load %arg9[%c0, %c0_1, %c0_2] : memref<2x8x32xf32, #tpu.memory_space<vmem>>, vector<2x8x32xf32>
    %c0_3 = arith.constant 0 : index
    %c0_4 = arith.constant 0 : index
    %c0_5 = arith.constant 0 : index
    %c0_6 = arith.constant 0 : index
    %4 = vector.load %arg3[%c0_3, %c0_4, %c0_5, %c0_6] : memref<1x2x2x32xf32, #tpu.memory_space<vmem>>, vector<1x2x2x32xf32>
    %5 = vector.shape_cast %4 : vector<1x2x2x32xf32> to vector<2x2x32xf32>
    %c0_7 = arith.constant 0 : index
    %c0_8 = arith.constant 0 : index
    %c0_9 = arith.constant 0 : index
    %6 = vector.load %arg7[%c0_7, %c0_8, %c0_9] : memref<1x6x128xf32, #tpu.memory_space<vmem>>, vector<1x6x128xf32>
    %7 = vector.shape_cast %6 : vector<1x6x128xf32> to vector<6x128xf32>
    %c0_10 = arith.constant 0 : index
    %c0_11 = arith.constant 0 : index
    %c0_12 = arith.constant 0 : index
    %8 = vector.load %arg4[%c0_10, %c0_11, %c0_12] : memref<1x8x9xbf16, #tpu.memory_space<vmem>>, vector<1x8x9xbf16>
    %9 = vector.shape_cast %8 : vector<1x8x9xbf16> to vector<8x9xbf16>
    %cst = arith.constant dense<0.000000e+00> : vector<2x8xf32>
    %10 = vector.multi_reduction <add>, %3, %cst [2] : vector<2x8x32xf32> to vector<2x8xf32>
    %11 = vector.shape_cast %10 : vector<2x8xf32> to vector<2x8x1xf32>
    %cst_13 = arith.constant 3.200000e+01 : f32
    %12 = vector.broadcast %cst_13 : f32 to vector<2x8x1xf32>
    %13 = arith.divf %11, %12 : vector<2x8x1xf32>
    %14 = vector.broadcast %13 : vector<2x8x1xf32> to vector<2x8x32xf32>
    %15 = arith.subf %3, %14 : vector<2x8x32xf32>
    %16 = arith.mulf %15, %15 : vector<2x8x32xf32>
    %cst_14 = arith.constant dense<0.000000e+00> : vector<2x8xf32>
    %17 = vector.multi_reduction <add>, %16, %cst_14 [2] : vector<2x8x32xf32> to vector<2x8xf32>
    %18 = vector.shape_cast %17 : vector<2x8xf32> to vector<2x8x1xf32>
    %cst_15 = arith.constant 3.200000e+01 : f32
    %19 = vector.broadcast %cst_15 : f32 to vector<2x8x1xf32>
    %20 = arith.divf %18, %19 : vector<2x8x1xf32>
    %21 = vector.broadcast %13 : vector<2x8x1xf32> to vector<2x8x32xf32>
    %22 = arith.subf %3, %21 : vector<2x8x32xf32>
    %cst_16 = arith.constant 9.99999974E-6 : f32
    %23 = vector.broadcast %cst_16 : f32 to vector<2x8x1xf32>
    %24 = arith.addf %20, %23 : vector<2x8x1xf32>
    %25 = math.rsqrt %24 : vector<2x8x1xf32>
    %26 = vector.broadcast %25 : vector<2x8x1xf32> to vector<2x8x32xf32>
    %27 = arith.mulf %22, %26 : vector<2x8x32xf32>
    %28 = vector.extract_strided_slice %5 {offsets = [0, 0, 0], sizes = [2, 1, 32], strides = [1, 1, 1]} : vector<2x2x32xf32> to vector<2x1x32xf32>
    %cst_17 = arith.constant 1.000000e+00 : f32
    %29 = vector.broadcast %cst_17 : f32 to vector<2x1x32xf32>
    %30 = arith.addf %29, %28 : vector<2x1x32xf32>
    %31 = vector.broadcast %30 : vector<2x1x32xf32> to vector<2x8x32xf32>
    %32 = arith.mulf %27, %31 : vector<2x8x32xf32>
    %33 = vector.extract_strided_slice %5 {offsets = [0, 1, 0], sizes = [2, 1, 32], strides = [1, 1, 1]} : vector<2x2x32xf32> to vector<2x1x32xf32>
    %34 = vector.broadcast %33 : vector<2x1x32xf32> to vector<2x8x32xf32>
    %35 = arith.addf %32, %34 : vector<2x8x32xf32>
    %36 = vector.extract_strided_slice %9 {offsets = [0, 0], sizes = [8, 8], strides = [1, 1]} : vector<8x9xbf16> to vector<8x8xbf16>
    %37 = vector.shape_cast %36 : vector<8x8xbf16> to vector<1x8x8xbf16>
    %38 = vector.broadcast %37 : vector<1x8x8xbf16> to vector<2x8x8xbf16>
    %39 = vector.extract_strided_slice %9 {offsets = [0, 8], sizes = [8, 1], strides = [1, 1]} : vector<8x9xbf16> to vector<8x1xbf16>
    %40 = arith.extf %39 : vector<8x1xbf16> to vector<8x1xf32>
    %41 = arith.truncf %35 : vector<2x8x32xf32> to vector<2x8x32xbf16>
    "tpu.trace_start"() <{level = 10 : i32, message = "bkl,bld->bkd"}> : () -> ()
    %cst_18 = arith.constant dense<0.000000e+00> : vector<2x8x32xf32>
    %42 = tpu.matmul %38, %41, %cst_18 {dimension_numbers = #tpu.dot_dimension_numbers<[2], [1], [1], [2], [0, 0, 0, 1, 1, 2], [0], [0]>} : vector<2x8x8xbf16>, vector<2x8x32xbf16>, vector<2x8x32xf32> -> vector<2x8x32xf32>
    "tpu.trace_stop"() : () -> ()
    %43 = vector.shape_cast %40 : vector<8x1xf32> to vector<1x8x1xf32>
    %44 = vector.broadcast %43 : vector<1x8x1xf32> to vector<2x8x32xf32>
    %45 = arith.addf %42, %44 : vector<2x8x32xf32>
    %cst_19 = arith.constant 0.000000e+00 : f32
    %46 = vector.broadcast %cst_19 : f32 to vector<2x8x32xf32>
    %47 = arith.maximumf %45, %46 : vector<2x8x32xf32>
    %48 = arith.addf %47, %35 : vector<2x8x32xf32>
    %49 = vector.shape_cast %48 : vector<2x8x32xf32> to vector<16x32xf32>
    %50 = arith.truncf %49 : vector<16x32xf32> to vector<16x32xbf16>
    %c0_20 = arith.constant 0 : index
    %c0_21 = arith.constant 0 : index
    %c0_22 = arith.constant 0 : index
    %51 = vector.load %arg5[%c0_20, %c0_21, %c0_22] : memref<1x32x128xbf16, #tpu.memory_space<vmem>>, vector<1x32x128xbf16>
    %52 = vector.shape_cast %51 : vector<1x32x128xbf16> to vector<32x128xbf16>
    %cst_23 = arith.constant dense<0.000000e+00> : vector<16x128xf32>
    %53 = tpu.matmul %50, %52, %cst_23 {dimension_numbers = #tpu.dot_dimension_numbers<[1], [0], [0], [1], [0, 0, 1, 1], [], []>} : vector<16x32xbf16>, vector<32x128xbf16>, vector<16x128xf32> -> vector<16x128xf32>
    %54 = vector.extract_strided_slice %7 {offsets = [0, 0], sizes = [1, 128], strides = [1, 1]} : vector<6x128xf32> to vector<1x128xf32>
    %55 = vector.broadcast %54 : vector<1x128xf32> to vector<16x128xf32>
    %56 = arith.addf %53, %55 : vector<16x128xf32>
    %57 = arith.negf %56 : vector<16x128xf32>
    %58 = math.exp %57 : vector<16x128xf32>
    %cst_24 = arith.constant 1.000000e+00 : f32
    %59 = vector.broadcast %cst_24 : f32 to vector<16x128xf32>
    %60 = arith.addf %59, %58 : vector<16x128xf32>
    %61 = arith.divf %59, %60 : vector<16x128xf32>
    %62 = arith.mulf %56, %61 : vector<16x128xf32>
    %63 = arith.truncf %62 : vector<16x128xf32> to vector<16x128xbf16>
    %c0_25 = arith.constant 0 : index
    %c0_26 = arith.constant 0 : index
    %c0_27 = arith.constant 0 : index
    %64 = vector.load %arg6[%c0_25, %c0_26, %c0_27] : memref<1x128x32xbf16, #tpu.memory_space<vmem>>, vector<1x128x32xbf16>
    %65 = vector.shape_cast %64 : vector<1x128x32xbf16> to vector<128x32xbf16>
    %cst_28 = arith.constant dense<0.000000e+00> : vector<16x32xf32>
    %66 = tpu.matmul %63, %65, %cst_28 {dimension_numbers = #tpu.dot_dimension_numbers<[1], [0], [0], [1], [0, 0, 1, 1], [], []>} : vector<16x128xbf16>, vector<128x32xbf16>, vector<16x32xf32> -> vector<16x32xf32>
    %67 = vector.extract_strided_slice %7 {offsets = [1, 0], sizes = [1, 32], strides = [1, 1]} : vector<6x128xf32> to vector<1x32xf32>
    %68 = vector.broadcast %67 : vector<1x32xf32> to vector<16x32xf32>
    %69 = arith.addf %66, %68 : vector<16x32xf32>
    %70 = vector.shape_cast %69 : vector<16x32xf32> to vector<2x8x32xf32>
    %71 = arith.addf %70, %48 : vector<2x8x32xf32>
    %cst_29 = arith.constant dense<0.000000e+00> : vector<2x8xf32>
    %72 = vector.multi_reduction <add>, %71, %cst_29 [2] : vector<2x8x32xf32> to vector<2x8xf32>
    %73 = vector.shape_cast %72 : vector<2x8xf32> to vector<2x8x1xf32>
    %cst_30 = arith.constant 3.200000e+01 : f32
    %74 = vector.broadcast %cst_30 : f32 to vector<2x8x1xf32>
    %75 = arith.divf %73, %74 : vector<2x8x1xf32>
    %76 = vector.broadcast %75 : vector<2x8x1xf32> to vector<2x8x32xf32>
    %77 = arith.subf %71, %76 : vector<2x8x32xf32>
    %78 = arith.mulf %77, %77 : vector<2x8x32xf32>
    %cst_31 = arith.constant dense<0.000000e+00> : vector<2x8xf32>
    %79 = vector.multi_reduction <add>, %78, %cst_31 [2] : vector<2x8x32xf32> to vector<2x8xf32>
    %80 = vector.shape_cast %79 : vector<2x8xf32> to vector<2x8x1xf32>
    %cst_32 = arith.constant 3.200000e+01 : f32
    %81 = vector.broadcast %cst_32 : f32 to vector<2x8x1xf32>
    %82 = arith.divf %80, %81 : vector<2x8x1xf32>
    %83 = vector.broadcast %75 : vector<2x8x1xf32> to vector<2x8x32xf32>
    %84 = arith.subf %71, %83 : vector<2x8x32xf32>
    %cst_33 = arith.constant 9.99999974E-6 : f32
    %85 = vector.broadcast %cst_33 : f32 to vector<2x8x1xf32>
    %86 = arith.addf %82, %85 : vector<2x8x1xf32>
    %87 = math.rsqrt %86 : vector<2x8x1xf32>
    %88 = vector.broadcast %87 : vector<2x8x1xf32> to vector<2x8x32xf32>
    %89 = arith.mulf %84, %88 : vector<2x8x32xf32>
    %90 = vector.extract_strided_slice %7 {offsets = [2, 0], sizes = [1, 32], strides = [1, 1]} : vector<6x128xf32> to vector<1x32xf32>
    %91 = vector.shape_cast %90 : vector<1x32xf32> to vector<1x1x32xf32>
    %92 = vector.broadcast %91 : vector<1x1x32xf32> to vector<2x8x32xf32>
    %93 = arith.mulf %89, %92 : vector<2x8x32xf32>
    %94 = vector.extract_strided_slice %7 {offsets = [3, 0], sizes = [1, 32], strides = [1, 1]} : vector<6x128xf32> to vector<1x32xf32>
    %95 = vector.shape_cast %94 : vector<1x32xf32> to vector<1x1x32xf32>
    %96 = vector.broadcast %95 : vector<1x1x32xf32> to vector<2x8x32xf32>
    %97 = arith.addf %93, %96 : vector<2x8x32xf32>
    %cst_34 = arith.constant dense<0.000000e+00> : vector<2x8xf32>
    %98 = vector.multi_reduction <add>, %97, %cst_34 [2] : vector<2x8x32xf32> to vector<2x8xf32>
    %99 = vector.shape_cast %98 : vector<2x8xf32> to vector<2x8x1xf32>
    %cst_35 = arith.constant 3.200000e+01 : f32
    %100 = vector.broadcast %cst_35 : f32 to vector<2x8x1xf32>
    %101 = arith.divf %99, %100 : vector<2x8x1xf32>
    %102 = vector.broadcast %101 : vector<2x8x1xf32> to vector<2x8x32xf32>
    %103 = arith.subf %97, %102 : vector<2x8x32xf32>
    %104 = arith.mulf %103, %103 : vector<2x8x32xf32>
    %cst_36 = arith.constant dense<0.000000e+00> : vector<2x8xf32>
    %105 = vector.multi_reduction <add>, %104, %cst_36 [2] : vector<2x8x32xf32> to vector<2x8xf32>
    %106 = vector.shape_cast %105 : vector<2x8xf32> to vector<2x8x1xf32>
    %cst_37 = arith.constant 3.200000e+01 : f32
    %107 = vector.broadcast %cst_37 : f32 to vector<2x8x1xf32>
    %108 = arith.divf %106, %107 : vector<2x8x1xf32>
    %109 = vector.broadcast %101 : vector<2x8x1xf32> to vector<2x8x32xf32>
    %110 = arith.subf %97, %109 : vector<2x8x32xf32>
    %cst_38 = arith.constant 9.99999974E-6 : f32
    %111 = vector.broadcast %cst_38 : f32 to vector<2x8x1xf32>
    %112 = arith.addf %108, %111 : vector<2x8x1xf32>
    %113 = math.rsqrt %112 : vector<2x8x1xf32>
    %114 = vector.broadcast %113 : vector<2x8x1xf32> to vector<2x8x32xf32>
    %115 = arith.mulf %110, %114 : vector<2x8x32xf32>
    %116 = vector.extract_strided_slice %7 {offsets = [4, 0], sizes = [1, 32], strides = [1, 1]} : vector<6x128xf32> to vector<1x32xf32>
    %117 = vector.shape_cast %116 : vector<1x32xf32> to vector<1x1x32xf32>
    %118 = vector.broadcast %117 : vector<1x1x32xf32> to vector<2x8x32xf32>
    %119 = arith.mulf %115, %118 : vector<2x8x32xf32>
    %120 = vector.extract_strided_slice %7 {offsets = [5, 0], sizes = [1, 32], strides = [1, 1]} : vector<6x128xf32> to vector<1x32xf32>
    %121 = vector.shape_cast %120 : vector<1x32xf32> to vector<1x1x32xf32>
    %122 = vector.broadcast %121 : vector<1x1x32xf32> to vector<2x8x32xf32>
    %123 = arith.addf %119, %122 : vector<2x8x32xf32>
    %c0_39 = arith.constant 0 : index
    %c0_40 = arith.constant 0 : index
    %c0_41 = arith.constant 0 : index
    %124 = vector.load %arg9[%c0_39, %c0_40, %c0_41] : memref<2x8x32xf32, #tpu.memory_space<vmem>>, vector<2x8x32xf32>
    tpu.vector_store %arg9[%c0_39, %c0_40, %c0_41], %123 {strides = array<i32>} : memref<2x8x32xf32, #tpu.memory_space<vmem>>, vector<2x8x32xf32>,
    %c2_i32 = arith.constant 2 : i32
    %125 = arith.cmpi eq, %arg1, %c2_i32 : i32
    %126 = arith.extui %125 : i1 to i32
    %c0_i32_42 = arith.constant 0 : i32
    %127 = arith.cmpi ne, %126, %c0_i32_42 : i32
    scf.if %127 {
      %c0_43 = arith.constant 0 : index
      %c0_44 = arith.constant 0 : index
      %c0_45 = arith.constant 0 : index
      %128 = vector.load %arg9[%c0_43, %c0_44, %c0_45] : memref<2x8x32xf32, #tpu.memory_space<vmem>>, vector<2x8x32xf32>
      %c0_46 = arith.constant 0 : index
      %c0_47 = arith.constant 0 : index
      %c0_48 = arith.constant 0 : index
      %129 = vector.load %arg8[%c0_46, %c0_47, %c0_48] : memref<2x8x32xf32, #tpu.memory_space<vmem>>, vector<2x8x32xf32>
      tpu.vector_store %arg8[%c0_46, %c0_47, %c0_48], %128 {strides = array<i32>} : memref<2x8x32xf32, #tpu.memory_space<vmem>>, vector<2x8x32xf32>,
    } else {
    }
    return
  }
  func.func @transform_0(%arg0: i32, %arg1: i32) -> (i32, i32, i32) {
    %c0_i32 = arith.constant 0 : i32
    %c0_i32_0 = arith.constant 0 : i32
    %c0_i32_1 = arith.constant 0 : i32
    return %arg0, %c0_i32, %c0_i32_0 : i32, i32, i32
  }
  func.func @transform_1(%arg0: i32, %arg1: i32) -> (i32, i32, i32, i32) {
    %c0_i32 = arith.constant 0 : i32
    %c0_i32_0 = arith.constant 0 : i32
    %c0_i32_1 = arith.constant 0 : i32
    return %arg1, %arg0, %c0_i32, %c0_i32_0 : i32, i32, i32, i32
  }
  func.func @transform_2(%arg0: i32, %arg1: i32) -> (i32, i32, i32) {
    %c0_i32 = arith.constant 0 : i32
    %c0_i32_0 = arith.constant 0 : i32
    %c0_i32_1 = arith.constant 0 : i32
    return %arg1, %c0_i32, %c0_i32_0 : i32, i32, i32
  }
  func.func @transform_3(%arg0: i32, %arg1: i32) -> (i32, i32, i32) {
    %c0_i32 = arith.constant 0 : i32
    %c0_i32_0 = arith.constant 0 : i32
    %c0_i32_1 = arith.constant 0 : i32
    return %arg1, %c0_i32, %c0_i32_0 : i32, i32, i32
  }
  func.func @transform_4(%arg0: i32, %arg1: i32) -> (i32, i32, i32) {
    %c0_i32 = arith.constant 0 : i32
    %c0_i32_0 = arith.constant 0 : i32
    %c0_i32_1 = arith.constant 0 : i32
    return %arg1, %c0_i32, %c0_i32_0 : i32, i32, i32
  }
  func.func @transform_5(%arg0: i32, %arg1: i32) -> (i32, i32, i32) {
    %c0_i32 = arith.constant 0 : i32
    %c0_i32_0 = arith.constant 0 : i32
    %c0_i32_1 = arith.constant 0 : i32
    return %arg1, %c0_i32, %c0_i32_0 : i32, i32, i32
  }
  func.func @transform_6(%arg0: i32, %arg1: i32) -> (i32, i32, i32) {
    %c0_i32 = arith.constant 0 : i32
    %c0_i32_0 = arith.constant 0 : i32
    %c0_i32_1 = arith.constant 0 : i32
    return %arg0, %c0_i32, %c0_i32_0 : i32, i32, i32
  }
}

</mosaic_0001>

<llo_original>
// kernel: decoder_forward.1
$region0: #{decoder_forward.1}
  #allocation0 [shape = 'u32[]', space=smem, size = 0x4, offset = 0x4, fixed_abs, tag = 'smem constant byte address 0x4 - core index']
  #allocation1 [shape = 'u32[144,128]{1,0:T(1,128)}', space=vmem, size = 0x12000, scoped, tag = 'internal scratch']
  #allocation2 [shape = 'f32[2,8,32]{2,1,0:T(8,128)}', space=vmem, size = 0x2000, scoped, tag = 'scratch operand']
  %s0 = inlined_call_operand.vmem [shape: f32[2,8,32], index: 0, kind: input, shape index: {}]
  %s1 = inlined_call_operand.vmem [shape: f32[3,2,2,32], index: 1, kind: input, shape index: {}]
  %s2 = inlined_call_operand.vmem [shape: bf16[3,8,9], index: 2, kind: input, shape index: {}]
  %s3 = inlined_call_operand.vmem [shape: bf16[3,32,128], index: 3, kind: input, shape index: {}]
  %s4 = inlined_call_operand.vmem [shape: bf16[3,128,32], index: 4, kind: input, shape index: {}]
  %s5 = inlined_call_operand.vmem [shape: f32[3,6,128], index: 5, kind: input, shape index: {}]
  %s6 = inlined_call_operand.hbm [shape: f32[2,8,32], index: 6, kind: output, shape index: {}]
  %s7 = sld [smem:[#allocation0]]
  $region65: #{decoder_forward.1} parent=0
    _
  %s9 = ssub.s32 1, %s7
  %s10 = scalar_select 0, %s9, %s7
  $region1: #{decoder_forward.1} parent=0
    #allocation3 [shape = 'u8[8192]{0}', space=vmem, size = 0x2000, scoped, tag = 'output window, operand 0, single buffered']
    #allocation4 [shape = 's32[2]{0}', space=sflag, size = 0x8, scoped, tag = 'scoped memory for decoder_forward.1']
    %11 = vsyncpa [#allocation4], 0
    loop: start=0, step=1, limit=5
    $region2: #{decoder_forward.1} parent=1 // loop_pre_header
      _
    $region3: #{decoder_forward.1} parent=1 // loop_header
      %s13 = sphi 0, %s17
      %p14 = scmp.ge.s32.totalorder %s13, 5
      %s20 = sphi 0, %s32
      %s21 = sphi 0, %s28
      %s22 = sphi 0, %s20
      %s23 = sphi 0, %s21
      %s24 = sphi 0, %s22
      %s25 = sphi 0, %s23
      %s35 = sphi 0, %s37
      %s38 = sphi 0, %s35
      %s39 = sphi 0, %s38
      %s55 = sphi 0, %s39
      %s63 = sphi 0, %s65
      %s66 = sphi 0, %s63
      %s67 = sphi 0, %s66
      %s83 = sphi 0, %s67
      %s89 = sphi 0, %s91
      %s92 = sphi 0, %s89
      %s93 = sphi 0, %s92
      %s109 = sphi 0, %s93
      %s115 = sphi 0, %s117
      %s118 = sphi 0, %s115
      %s119 = sphi 0, %s118
      %s135 = sphi 0, %s119
      %s141 = sphi 0, %s143
      %s144 = sphi 0, %s141
      %s145 = sphi 0, %s144
      %s161 = sphi 0, %s145
      %s167 = sphi 0, %s169
      %s170 = sphi 0, %s167
      %s171 = sphi 0, %s170
      %s187 = sphi 0, %s171
      %s193 = sphi 0, %s195
      %s196 = sphi 0, %s193
      %s197 = sphi 0, %s196
      %s213 = sphi 0, %s197
    $region4: #{decoder_forward.1} parent=1 // loop_header_branch
      %16 = sbr.rel (%p14) target = $region8
    $region5: #{decoder_forward.1} parent=1 // loop_body
      %s18 = ssub.s32 %s13, 1
      %s19 = ssub.s32 %s13, 2
      %s26 = sadd.s32 1, %s21
      %p27 = scmp.ge.s32.totalorder %s26, 3
      %s28 = scalar_select %p27, 0, %s26
      %s29 = sadd.s32 1, %s20
      %s30 = scalar_select %p27, %s29, %s20
      %p31 = scmp.ge.s32.totalorder %s30, 1
      %s32 = scalar_select %p31, 0, %s30
      %s33 = ssub.s32 %s20, %s32
      %p34 = scmp.eq.s32.totalorder %s33, 0
      %s36 = sadd.s32 %s35, 1
      %s37 = scalar_select %p34, %s35, %s36
      %p40 = pneg %p34
      %p41 = scmp.eq.s32.totalorder %s13, 2
      %p42 = por %p40, %p41
      %p43 = scmp.ne.s32.totalorder %s35, %s38
      %p44 = scmp.eq.s32.totalorder %s13, 0
      %p45 = por %p43, %p44
      %p46 = scmp.ne.s32.totalorder %s35, %s38
      %p47 = scmp.eq.s32.totalorder %s18, 2
      %p48 = por %p46, %p47
      %p49 = scmp.ne.s32.totalorder %s38, %s39
      %p50 = scmp.eq.s32.totalorder %s18, 0
      %p51 = por %p49, %p50
      %p52 = scmp.ne.s32.totalorder %s38, %s39
      %p53 = scmp.eq.s32.totalorder %s19, 2
      %p54 = por %p52, %p53
      %p56 = scmp.ne.s32.totalorder %s39, %s55
      %p57 = scmp.eq.s32.totalorder %s19, 0
      %p58 = por %p56, %p57
      %s59 = ssub.s32 %s21, %s28
      %s60 = ssub.s32 %s20, %s32
      %s61 = sor.u32 %s59, %s60
      %p62 = scmp.eq.s32.totalorder %s61, 0
      %s64 = sadd.s32 %s63, 1
      %s65 = scalar_select %p62, %s63, %s64
      %p68 = pneg %p62
      %p69 = scmp.eq.s32.totalorder %s13, 2
      %p70 = por %p68, %p69
      %p71 = scmp.ne.s32.totalorder %s63, %s66
      %p72 = scmp.eq.s32.totalorder %s13, 0
      %p73 = por %p71, %p72
      %p74 = scmp.ne.s32.totalorder %s63, %s66
      %p75 = scmp.eq.s32.totalorder %s18, 2
      %p76 = por %p74, %p75
      %p77 = scmp.ne.s32.totalorder %s66, %s67
      %p78 = scmp.eq.s32.totalorder %s18, 0
      %p79 = por %p77, %p78
      %p80 = scmp.ne.s32.totalorder %s66, %s67
      %p81 = scmp.eq.s32.totalorder %s19, 2
      %p82 = por %p80, %p81
      %p84 = scmp.ne.s32.totalorder %s67, %s83
      %p85 = scmp.eq.s32.totalorder %s19, 0
      %p86 = por %p84, %p85
      %s87 = ssub.s32 %s21, %s28
      %p88 = scmp.eq.s32.totalorder %s87, 0
      %s90 = sadd.s32 %s89, 1
      %s91 = scalar_select %p88, %s89, %s90
      %p94 = pneg %p88
      %p95 = scmp.eq.s32.totalorder %s13, 2
      %p96 = por %p94, %p95
      %p97 = scmp.ne.s32.totalorder %s89, %s92
      %p98 = scmp.eq.s32.totalorder %s13, 0
      %p99 = por %p97, %p98
      %p100 = scmp.ne.s32.totalorder %s89, %s92
      %p101 = scmp.eq.s32.totalorder %s18, 2
      %p102 = por %p100, %p101
      %p103 = scmp.ne.s32.totalorder %s92, %s93
      %p104 = scmp.eq.s32.totalorder %s18, 0
      %p105 = por %p103, %p104
      %p106 = scmp.ne.s32.totalorder %s92, %s93
      %p107 = scmp.eq.s32.totalorder %s19, 2
      %p108 = por %p106, %p107
      %p110 = scmp.ne.s32.totalorder %s93, %s109
      %p111 = scmp.eq.s32.totalorder %s19, 0
      %p112 = por %p110, %p111
      %s113 = ssub.s32 %s21, %s28
      %p114 = scmp.eq.s32.totalorder %s113, 0
      %s116 = sadd.s32 %s115, 1
      %s117 = scalar_select %p114, %s115, %s116
      %p120 = pneg %p114
      %p121 = scmp.eq.s32.totalorder %s13, 2
      %p122 = por %p120, %p121
      %p123 = scmp.ne.s32.totalorder %s115, %s118
      %p124 = scmp.eq.s32.totalorder %s13, 0
      %p125 = por %p123, %p124
      %p126 = scmp.ne.s32.totalorder %s115, %s118
      %p127 = scmp.eq.s32.totalorder %s18, 2
      %p128 = por %p126, %p127
      %p129 = scmp.ne.s32.totalorder %s118, %s119
      %p130 = scmp.eq.s32.totalorder %s18, 0
      %p131 = por %p129, %p130
      %p132 = scmp.ne.s32.totalorder %s118, %s119
      %p133 = scmp.eq.s32.totalorder %s19, 2
      %p134 = por %p132, %p133
      %p136 = scmp.ne.s32.totalorder %s119, %s135
      %p137 = scmp.eq.s32.totalorder %s19, 0
      %p138 = por %p136, %p137
      %s139 = ssub.s32 %s21, %s28
      %p140 = scmp.eq.s32.totalorder %s139, 0
      %s142 = sadd.s32 %s141, 1
      %s143 = scalar_select %p140, %s141, %s142
      %p146 = pneg %p140
      %p147 = scmp.eq.s32.totalorder %s13, 2
      %p148 = por %p146, %p147
      %p149 = scmp.ne.s32.totalorder %s141, %s144
      %p150 = scmp.eq.s32.totalorder %s13, 0
      %p151 = por %p149, %p150
      %p152 = scmp.ne.s32.totalorder %s141, %s144
      %p153 = scmp.eq.s32.totalorder %s18, 2
      %p154 = por %p152, %p153
      %p155 = scmp.ne.s32.totalorder %s144, %s145
      %p156 = scmp.eq.s32.totalorder %s18, 0
      %p157 = por %p155, %p156
      %p158 = scmp.ne.s32.totalorder %s144, %s145
      %p159 = scmp.eq.s32.totalorder %s19, 2
      %p160 = por %p158, %p159
      %p162 = scmp.ne.s32.totalorder %s145, %s161
      %p163 = scmp.eq.s32.totalorder %s19, 0
      %p164 = por %p162, %p163
      %s165 = ssub.s32 %s21, %s28
      %p166 = scmp.eq.s32.totalorder %s165, 0
      %s168 = sadd.s32 %s167, 1
      %s169 = scalar_select %p166, %s167, %s168
      %p172 = pneg %p166
      %p173 = scmp.eq.s32.totalorder %s13, 2
      %p174 = por %p172, %p173
      %p175 = scmp.ne.s32.totalorder %s167, %s170
      %p176 = scmp.eq.s32.totalorder %s13, 0
      %p177 = por %p175, %p176
      %p178 = scmp.ne.s32.totalorder %s167, %s170
      %p179 = scmp.eq.s32.totalorder %s18, 2
      %p180 = por %p178, %p179
      %p181 = scmp.ne.s32.totalorder %s170, %s171
      %p182 = scmp.eq.s32.totalorder %s18, 0
      %p183 = por %p181, %p182
      %p184 = scmp.ne.s32.totalorder %s170, %s171
      %p185 = scmp.eq.s32.totalorder %s19, 2
      %p186 = por %p184, %p185
      %p188 = scmp.ne.s32.totalorder %s171, %s187
      %p189 = scmp.eq.s32.totalorder %s19, 0
      %p190 = por %p188, %p189
      %s191 = ssub.s32 %s20, %s32
      %p192 = scmp.eq.s32.totalorder %s191, 0
      %s194 = sadd.s32 %s193, 1
      %s195 = scalar_select %p192, %s193, %s194
      %p198 = pneg %p192
      %p199 = scmp.eq.s32.totalorder %s13, 2
      %p200 = por %p198, %p199
      %p201 = scmp.ne.s32.totalorder %s193, %s196
      %p202 = scmp.eq.s32.totalorder %s13, 0
      %p203 = por %p201, %p202
      %p204 = scmp.ne.s32.totalorder %s193, %s196
      %p205 = scmp.eq.s32.totalorder %s18, 2
      %p206 = por %p204, %p205
      %p207 = scmp.ne.s32.totalorder %s196, %s197
      %p208 = scmp.eq.s32.totalorder %s18, 0
      %p209 = por %p207, %p208
      %p210 = scmp.ne.s32.totalorder %s196, %s197
      %p211 = scmp.eq.s32.totalorder %s19, 2
      %p212 = por %p210, %p211
      %p214 = scmp.ne.s32.totalorder %s197, %s213
      %p215 = scmp.eq.s32.totalorder %s19, 0
      %p216 = por %p214, %p215
      %p217 = scmp.le.s32.totalorder 1, %s13
      %p218 = scmp.lt.s32.totalorder %s13, 4
      %p219 = pnand %p217, %p218
      %p220 = pneg %p219
      // Predicated region
      $region9: #{decoder_forward.1} parent=5 // pred_check
        _
      $region10: #{decoder_forward.1} parent=5 // pred_check_branch
        %222 = sbr.rel (%p219) target = $region12
      $region11: #{decoder_forward.1} parent=5 // pred_region
        %s223 = ssub.s32 %s13, 1
        // Predicated region
        $region13: #{decoder_forward.1} parent=11 // pred_check
          %p224 = pneg %p51
        $region14: #{decoder_forward.1} parent=11 // pred_check_branch
          %226 = sbr.rel (%p224) target = $region16
        $region15: #{decoder_forward.1} parent=11 // pred_region
          %s227 = smul.u32 2, %s22
          %p228 = scmp.lt.s32.totalorder %s227, 1
          %s229 = scalar_select %p228, %s227, 1
          %s230 = smul.addr %s229, 8
          %s231 = scalar_lea.vmem %s0, %s230
          %s232 = smul.u32 2, %s22
        $region16: #{decoder_forward.1} parent=11 // pred_fallthru
          _
      $region12: #{decoder_forward.1} parent=5 // pred_fallthru
        _
      %p233 = scmp.lt.s32.totalorder %s13, 3
      // Predicated region
      $region17: #{decoder_forward.1} parent=5 // pred_check
        %p234 = pneg %p233
      $region18: #{decoder_forward.1} parent=5 // pred_check_branch
        %236 = sbr.rel (%p234) target = $region20
      $region19: #{decoder_forward.1} parent=5 // pred_region
        // Predicated region
        $region21: #{decoder_forward.1} parent=19 // pred_check
          %p237 = pneg %p73
        $region22: #{decoder_forward.1} parent=19 // pred_check_branch
          %239 = sbr.rel (%p237) target = $region24
        $region23: #{decoder_forward.1} parent=19 // pred_region
          %s240 = smul.u32 2, %s20
          %p241 = scmp.lt.s32.totalorder %s21, 2
          %s242 = scalar_select %p241, %s21, 2
          %p243 = scmp.lt.s32.totalorder %s240, 1
          %s244 = scalar_select %p243, %s240, 1
          %s245 = smul.addr %s242, 2
          %s246 = sadd.s32 %s244, %s245
          %s247 = smul.addr %s246, 2
          %s248 = scalar_lea.vmem %s1, %s247
          %s249 = smul.u32 2, %s20
        $region24: #{decoder_forward.1} parent=19 // pred_fallthru
          _
        // Predicated region
        $region25: #{decoder_forward.1} parent=19 // pred_check
          %p250 = pneg %p99
        $region26: #{decoder_forward.1} parent=19 // pred_check_branch
          %252 = sbr.rel (%p250) target = $region28
        $region27: #{decoder_forward.1} parent=19 // pred_region
          %p253 = scmp.lt.s32.totalorder %s21, 2
          %s254 = scalar_select %p253, %s21, 2
          %s255 = smul.addr %s254, 4
          %s256 = scalar_lea.vmem %s2, %s255
        $region28: #{decoder_forward.1} parent=19 // pred_fallthru
          _
        // Predicated region
        $region29: #{decoder_forward.1} parent=19 // pred_check
          %p257 = pneg %p125
        $region30: #{decoder_forward.1} parent=19 // pred_check_branch
          %259 = sbr.rel (%p257) target = $region32
        $region31: #{decoder_forward.1} parent=19 // pred_region
          %p260 = scmp.lt.s32.totalorder %s21, 2
          %s261 = scalar_select %p260, %s21, 2
          %s262 = smul.addr %s261, 4
          %s263 = smul.addr %s262, 4
          %s264 = scalar_lea.vmem %s3, %s263
        $region32: #{decoder_forward.1} parent=19 // pred_fallthru
          _
        // Predicated region
        $region33: #{decoder_forward.1} parent=19 // pred_check
          %p265 = pneg %p151
        $region34: #{decoder_forward.1} parent=19 // pred_check_branch
          %267 = sbr.rel (%p265) target = $region36
        $region35: #{decoder_forward.1} parent=19 // pred_region
          %p268 = scmp.lt.s32.totalorder %s21, 2
          %s269 = scalar_select %p268, %s21, 2
          %s270 = smul.addr %s269, 16
          %s271 = smul.addr %s270, 4
          %s272 = scalar_lea.vmem %s4, %s271
        $region36: #{decoder_forward.1} parent=19 // pred_fallthru
          _
        // Predicated region
        $region37: #{decoder_forward.1} parent=19 // pred_check
          %p273 = pneg %p177
        $region38: #{decoder_forward.1} parent=19 // pred_check_branch
          %275 = sbr.rel (%p273) target = $region40
        $region39: #{decoder_forward.1} parent=19 // pred_region
          %p276 = scmp.lt.s32.totalorder %s21, 2
          %s277 = scalar_select %p276, %s21, 2
          %s278 = smul.addr %s277, 8
          %s279 = scalar_lea.vmem %s5, %s278
        $region40: #{decoder_forward.1} parent=19 // pred_fallthru
          _
      $region20: #{decoder_forward.1} parent=5 // pred_fallthru
        _
      %p280 = scmp.le.s32.totalorder 1, %s13
      %p281 = scmp.lt.s32.totalorder %s13, 4
      %p282 = pnand %p280, %p281
      %p283 = pneg %p282
      // Predicated region
      $region41: #{decoder_forward.1} parent=5 // pred_check
        _
      $region42: #{decoder_forward.1} parent=5 // pred_check_branch
        %285 = sbr.rel (%p282) target = $region44
      $region43: #{decoder_forward.1} parent=5 // pred_region
        %s286 = ssub.s32 %s13, 1
        %s287 = smul.u32 2, %s22
        %p288 = scmp.lt.s32.totalorder %s287, 1
        %s289 = scalar_select %p288, %s287, 1
        %s290 = smul.addr %s289, 8
        %s291 = scalar_lea.vmem %s0, %s290
        %p292 = pneg %p51
        %p293 = pneg %p48
        %s294 = smul.u32 2, %s22
        %p295 = scmp.lt.s32.totalorder %s23, 2
        %s296 = scalar_select %p295, %s23, 2
        %p297 = scmp.lt.s32.totalorder %s294, 1
        %s298 = scalar_select %p297, %s294, 1
        %s299 = smul.addr %s296, 2
        %s300 = sadd.s32 %s298, %s299
        %s301 = smul.addr %s300, 2
        %s302 = scalar_lea.vmem %s1, %s301
        %p303 = pneg %p79
        %p304 = pneg %p76
        %p305 = scmp.lt.s32.totalorder %s23, 2
        %s306 = scalar_select %p305, %s23, 2
        %s307 = smul.addr %s306, 4
        %s308 = scalar_lea.vmem %s2, %s307
        %p309 = pneg %p105
        %p310 = pneg %p102
        %p311 = scmp.lt.s32.totalorder %s23, 2
        %s312 = scalar_select %p311, %s23, 2
        %s313 = smul.addr %s312, 4
        %s314 = smul.addr %s313, 4
        %s315 = scalar_lea.vmem %s3, %s314
        %p316 = pneg %p131
        %p317 = pneg %p128
        %p318 = scmp.lt.s32.totalorder %s23, 2
        %s319 = scalar_select %p318, %s23, 2
        %s320 = smul.addr %s319, 16
        %s321 = smul.addr %s320, 4
        %s322 = scalar_lea.vmem %s4, %s321
        %p323 = pneg %p157
        %p324 = pneg %p154
        %p325 = scmp.lt.s32.totalorder %s23, 2
        %s326 = scalar_select %p325, %s23, 2
        %s327 = smul.addr %s326, 8
        %s328 = scalar_lea.vmem %s5, %s327
        %p329 = pneg %p183
        %p330 = pneg %p180
        %p331 = pneg %p209
        %p332 = pneg %p206
        %s333 = smul.u32 2, %s22
        %p334 = scmp.lt.s32.totalorder %s333, 1
        %s335 = scalar_select %p334, %s333, 1
        %s336 = smul.addr %s335, 8
        %s337 = scalar_lea.vmem %s0, %s336
        %s338 = smul.u32 2, %s22
        %s339 = smul.u32 2, %s22
        %p340 = scmp.lt.s32.totalorder %s23, 2
        %s341 = scalar_select %p340, %s23, 2
        %p342 = scmp.lt.s32.totalorder %s339, 1
        %s343 = scalar_select %p342, %s339, 1
        %s344 = smul.addr %s341, 2
        %s345 = sadd.s32 %s343, %s344
        %s346 = smul.addr %s345, 2
        %s347 = scalar_lea.vmem %s1, %s346
        %s348 = smul.u32 2, %s22
        %p349 = scmp.lt.s32.totalorder %s23, 2
        %s350 = scalar_select %p349, %s23, 2
        %s351 = smul.addr %s350, 4
        %s352 = scalar_lea.vmem %s2, %s351
        %p353 = scmp.lt.s32.totalorder %s23, 2
        %s354 = scalar_select %p353, %s23, 2
        %s355 = smul.addr %s354, 4
        %s356 = smul.addr %s355, 4
        %s357 = scalar_lea.vmem %s3, %s356
        %p358 = scmp.lt.s32.totalorder %s23, 2
        %s359 = scalar_select %p358, %s23, 2
        %s360 = smul.addr %s359, 16
        %s361 = smul.addr %s360, 4
        %s362 = scalar_lea.vmem %s4, %s361
        %p363 = scmp.lt.s32.totalorder %s23, 2
        %s364 = scalar_select %p363, %s23, 2
        %s365 = smul.addr %s364, 8
        %s366 = scalar_lea.vmem %s5, %s365
        %s367 = smul.u32 2, %s22
        %p369 = scmp.eq.s32.totalorder %s23, 0
        // Predicated region
        $region45: #{decoder_forward.1} parent=43 // pred_check
          %p370 = pneg %p369
        $region46: #{decoder_forward.1} parent=43 // pred_check_branch
          %372 = sbr.rel (%p370) target = $region48
        $region47: #{decoder_forward.1} parent=43 // pred_region
          %v373 = vld [vmem:[%s337] sm:$0xff]
          %v374 = vld [vmem:[%s337 + $0x8] sm:$0xff]
          %vm375 = vcmask 261120
          %376 = vst.msk [vmem:[#allocation2] sm:$0xff] %vm375, %v373
          %377 = vst.msk [vmem:[#allocation2 + $0x8] sm:$0xff] %vm375, %v374
        $region48: #{decoder_forward.1} parent=43 // pred_fallthru
          _
        %v378 = vld [vmem:[#allocation2] sm:$0xff]
        %v379 = vld [vmem:[#allocation2 + $0x8] sm:$0xff]
        %v380 = vld [vmem:[%s347] sm:$0x3]
        %v381 = vld [vmem:[%s347 + $0x2] sm:$0x3]
        %v382 = vld [vmem:[%s366] sm:$0x3f]
        %v383 = vld [vmem:[%s352] sm:$0xf]
        %vm384 = vcmask 261120
        %v385 = vsel %vm384, %v378, 0.0
        %386 = vadd.xlane.f32.xlu0 %v385
        %v387 = vpop.xlane.xlu0 %386
        %v388 = vsel %vm384, %v379, 0.0
        %389 = vadd.xlane.f32.xlu0 %v388
        %v390 = vpop.xlane.xlu0 %389
        %v391 = vrcp.pop 32.0
        %v392 = vmul.f32 %v387, %v391
        %v393 = vmul.f32 %v390, %v391
        %v394 = vsub.f32 %v378, %v392
        %v395 = vsub.f32 %v379, %v393
        %v396 = vmul.f32 %v394, %v394
        %v397 = vmul.f32 %v395, %v395
        %v398 = vsel %vm384, %v396, 0.0
        %399 = vadd.xlane.f32.xlu0 %v398
        %v400 = vpop.xlane.xlu0 %399
        %v401 = vsel %vm384, %v397, 0.0
        %402 = vadd.xlane.f32.xlu0 %v401
        %v403 = vpop.xlane.xlu0 %402
        %v404 = vmul.f32 %v400, %v391
        %v405 = vmul.f32 %v403, %v391
        %v406 = vadd.f32 %v404, 1e-05
        %v407 = vadd.f32 %v405, 1e-05
        %v408 = vrsqrt.pop %v406
        %v409 = vrsqrt.pop %v407
        %v410 = vmul.f32 %v394, %v408
        %v411 = vmul.f32 %v395, %v409
        %v412 = vadd.f32 %v380, 1.0
        %v413 = vadd.f32 %v381, 1.0
        %v414 = vlaneseq
        %v415 = vshrl.u32 %v414, 7
        %v416 = vsub.s32 0, %v415
        %v417 = vrot.slane %v412, %v416
        %v418 = vlaneseq
        %v419 = vshrl.u32 %v418, 7
        %v420 = vsub.s32 0, %v419
        %v421 = vrot.slane %v413, %v420
        %v422 = vmul.f32 %v410, %v417
        %v423 = vmul.f32 %v411, %v421
        %v424 = vlaneseq
        %v425 = vshrl.u32 %v424, 7
        %v426 = vsub.s32 1, %v425
        %v427 = vrot.slane %v380, %v426
        %v428 = vlaneseq
        %v429 = vshrl.u32 %v428, 7
        %v430 = vsub.s32 1, %v429
        %v431 = vrot.slane %v381, %v430
        %v432 = vadd.f32 %v422, %v427
        %v433 = vadd.f32 %v423, %v431
        %v434 = vunpack.c.l.bf16 %v383
        %v435 = vpack.c.bf16 %v432, %v432
        %v436 = vpack.c.bf16 %v433, %v433
        %438 = vset.pattern.permute.xlu0 8
        %439 = vperm.xlu0 %438, %v434
        %v440 = vpop.permute.xlu0 %439
        %vm442 = vcmask 64512
        %v444 = vsel %vm442, %v383, 0
        %vm446 = vcmask 1043456
        %v448 = vsel %vm446, %v435, 0
        %450 = vmatprep.subr.bf16.mxu0 0
        %451 = vmatpush1.bf16.msra.mxu0 %v448
        %452 = vmatprep.subr.bf16.mxu0 0
        %453 = vmatpush1.bf16.msra.mxu0 0
        %454 = vmatprep.subr.bf16.mxu0 0
        %455 = vmatpush1.bf16.msra.mxu0 0
        %456 = vmatprep.subr.bf16.mxu0 0
        %457 = vmatpush1.bf16.msra.mxu0 0
        %458 = vmatprep.subr.bf16.mxu0 0
        %459 = vmatpush1.bf16.msra.mxu0 0
        %460 = vmatprep.subr.bf16.mxu0 0
        %461 = vmatpush1.bf16.msra.mxu0 0
        %462 = vmatprep.subr.bf16.mxu0 0
        %463 = vmatpush1.bf16.msra.mxu0 0
        %464 = vmatprep.subr.bf16.mxu0 0
        %465 = vmatpush1.bf16.msra.mxu0 0
        %466 = vmatprep.subr.bf16.mxu0 0
        %467 = vmatpush1.bf16.msra.mxu0 0
        %468 = vmatprep.subr.bf16.mxu0 0
        %469 = vmatpush1.bf16.msra.mxu0 0
        %470 = vmatprep.subr.bf16.mxu0 0
        %471 = vmatpush1.bf16.msra.mxu0 0
        %472 = vmatprep.subr.bf16.mxu0 0
        %473 = vmatpush1.bf16.msra.mxu0 0
        %474 = vmatprep.subr.bf16.mxu0 0
        %475 = vmatpush1.bf16.msra.mxu0 0
        %476 = vmatprep.subr.bf16.mxu0 0
        %477 = vmatpush1.bf16.msra.mxu0 0
        %478 = vmatprep.subr.bf16.mxu0 0
        %479 = vmatpush1.bf16.msra.mxu0 0
        %480 = vmatprep.subr.bf16.mxu0 0
        %481 = vmatpush1.bf16.msra.mxu0 0
        %482 = vmatprep.mubr.bf16.mxu0 0
        %483 = vmatmul.mubr.bf16.gmra.mrb[0].mxu0 %v444
        %v484 = vpop.f32.mrb[0].mxu0
        %v485 = vadd.f32 %v440, %v484
        %v486 = vpop.f32.mrb[0].mxu0
        %v487 = vpop.f32.mrb[0].mxu0
        %v488 = vpop.f32.mrb[0].mxu0
        %489 = vdwg.mxu0
        %v491 = vsel %vm446, %v436, 0
        %493 = vmatprep.subr.bf16.mxu0 0
        %494 = vmatpush1.bf16.msra.mxu0 %v491
        %495 = vmatprep.subr.bf16.mxu0 0
        %496 = vmatpush1.bf16.msra.mxu0 0
        %497 = vmatprep.subr.bf16.mxu0 0
        %498 = vmatpush1.bf16.msra.mxu0 0
        %499 = vmatprep.subr.bf16.mxu0 0
        %500 = vmatpush1.bf16.msra.mxu0 0
        %501 = vmatprep.subr.bf16.mxu0 0
        %502 = vmatpush1.bf16.msra.mxu0 0
        %503 = vmatprep.subr.bf16.mxu0 0
        %504 = vmatpush1.bf16.msra.mxu0 0
        %505 = vmatprep.subr.bf16.mxu0 0
        %506 = vmatpush1.bf16.msra.mxu0 0
        %507 = vmatprep.subr.bf16.mxu0 0
        %508 = vmatpush1.bf16.msra.mxu0 0
        %509 = vmatprep.subr.bf16.mxu0 0
        %510 = vmatpush1.bf16.msra.mxu0 0
        %511 = vmatprep.subr.bf16.mxu0 0
        %512 = vmatpush1.bf16.msra.mxu0 0
        %513 = vmatprep.subr.bf16.mxu0 0
        %514 = vmatpush1.bf16.msra.mxu0 0
        %515 = vmatprep.subr.bf16.mxu0 0
        %516 = vmatpush1.bf16.msra.mxu0 0
        %517 = vmatprep.subr.bf16.mxu0 0
        %518 = vmatpush1.bf16.msra.mxu0 0
        %519 = vmatprep.subr.bf16.mxu0 0
        %520 = vmatpush1.bf16.msra.mxu0 0
        %521 = vmatprep.subr.bf16.mxu0 0
        %522 = vmatpush1.bf16.msra.mxu0 0
        %523 = vmatprep.subr.bf16.mxu0 0
        %524 = vmatpush1.bf16.msra.mxu0 0
        %525 = vmatprep.mubr.bf16.mxu0 0
        %526 = vmatmul.mubr.bf16.gmra.mrb[0].mxu0 %v444
        %v527 = vpop.f32.mrb[0].mxu0
        %v528 = vadd.f32 %v440, %v527
        %v529 = vpop.f32.mrb[0].mxu0
        %v530 = vpop.f32.mrb[0].mxu0
        %v531 = vpop.f32.mrb[0].mxu0
        %532 = vdwg.mxu0
        %v533 = vmax.f32 %v485, 0.0
        %v534 = vmax.f32 %v528, 0.0
        %v535 = vadd.f32 %v533, %v432
        %v536 = vadd.f32 %v534, %v433
        %v537 = vpack.c.bf16 %v536, %v535
        %v538 = vld [vmem:[%s357] sm:$0xf]
        %v539 = vld [vmem:[%s357 + $0x4] sm:$0xf]
        %v540 = vld [vmem:[%s357 + $0x8] sm:$0xf]
        %v541 = vld [vmem:[%s357 + $0xc] sm:$0xf]
        %v542 = vlaneseq
        %v543 = vshrl.u32 %v542, 7
        %v544 = vsub.s32 0, %v543
        %v545 = vrot.slane %v382, %v544
        %v550 = vunpack.c.l.b16 %v538
        %v551 = vunpack.c.l.b16 %v539
        %v552 = vunpack.c.l.b16 %v540
        %v553 = vunpack.c.l.b16 %v541
        %v554 = vpack.c.b16 %v551, %v550
        %v555 = vpack.c.b16 %v553, %v552
        %v559 = vsel %vm384, %v537, 0
        %561 = vmatprep.subr.bf16.mxu0 0
        %562 = vmatpush1.bf16.msra.mxu0 %v554
        %563 = vmatprep.subr.bf16.mxu0 0
        %564 = vmatpush1.bf16.msra.mxu0 %v555
        %565 = vmatprep.subr.bf16.mxu0 0
        %566 = vmatpush1.bf16.msra.mxu0 0
        %567 = vmatprep.subr.bf16.mxu0 0
        %568 = vmatpush1.bf16.msra.mxu0 0
        %569 = vmatprep.subr.bf16.mxu0 0
        %570 = vmatpush1.bf16.msra.mxu0 0
        %571 = vmatprep.subr.bf16.mxu0 0
        %572 = vmatpush1.bf16.msra.mxu0 0
        %573 = vmatprep.subr.bf16.mxu0 0
        %574 = vmatpush1.bf16.msra.mxu0 0
        %575 = vmatprep.subr.bf16.mxu0 0
        %576 = vmatpush1.bf16.msra.mxu0 0
        %577 = vmatprep.subr.bf16.mxu0 0
        %578 = vmatpush1.bf16.msra.mxu0 0
        %579 = vmatprep.subr.bf16.mxu0 0
        %580 = vmatpush1.bf16.msra.mxu0 0
        %581 = vmatprep.subr.bf16.mxu0 0
        %582 = vmatpush1.bf16.msra.mxu0 0
        %583 = vmatprep.subr.bf16.mxu0 0
        %584 = vmatpush1.bf16.msra.mxu0 0
        %585 = vmatprep.subr.bf16.mxu0 0
        %586 = vmatpush1.bf16.msra.mxu0 0
        %587 = vmatprep.subr.bf16.mxu0 0
        %588 = vmatpush1.bf16.msra.mxu0 0
        %589 = vmatprep.subr.bf16.mxu0 0
        %590 = vmatpush1.bf16.msra.mxu0 0
        %591 = vmatprep.subr.bf16.mxu0 0
        %592 = vmatpush1.bf16.msra.mxu0 0
        %593 = vmatprep.mubr.bf16.mxu0 0
        %594 = vmatmul.mubr.bf16.gmra.mrb[0].mxu0 %v559
        %v595 = vpop.f32.mrb[0].mxu0
        %v596 = vadd.f32 %v545, %v595
        %v597 = vpop.f32.mrb[0].mxu0
        %v598 = vpop.f32.mrb[0].mxu0
        %v599 = vadd.f32 %v545, %v598
        %v600 = vpop.f32.mrb[0].mxu0
        %601 = vdwg.mxu0
        %v602 = vxor.u32 %v596, 2147483648
        %v603 = vxor.u32 %v599, 2147483648
        %v604 = vmul.f32 %v602, 1.442695
        %v605 = vpow.pop %v604
        %v606 = vmul.f32 %v603, 1.442695
        %v607 = vpow.pop %v606
        %v608 = vadd.f32 %v605, 1.0
        %v609 = vadd.f32 %v607, 1.0
        %v610 = vrcp.pop %v608
        %v611 = vmul.f32 1.0, %v610
        %v612 = vrcp.pop %v609
        %v613 = vmul.f32 1.0, %v612
        %v614 = vmul.f32 %v596, %v611
        %v615 = vmul.f32 %v599, %v613
        %v616 = vpack.c.bf16 %v615, %v614
        %v617 = vld [vmem:[%s362] sm:$0xf]
        %v618 = vld [vmem:[%s362 + $0x4] sm:$0xf]
        %v619 = vld [vmem:[%s362 + $0x8] sm:$0xf]
        %v620 = vld [vmem:[%s362 + $0xc] sm:$0xf]
        %v621 = vld [vmem:[%s362 + $0x10] sm:$0xf]
        %v622 = vld [vmem:[%s362 + $0x14] sm:$0xf]
        %v623 = vld [vmem:[%s362 + $0x18] sm:$0xf]
        %v624 = vld [vmem:[%s362 + $0x1c] sm:$0xf]
        %v625 = vld [vmem:[%s362 + $0x20] sm:$0xf]
        %v626 = vld [vmem:[%s362 + $0x24] sm:$0xf]
        %v627 = vld [vmem:[%s362 + $0x28] sm:$0xf]
        %v628 = vld [vmem:[%s362 + $0x2c] sm:$0xf]
        %v629 = vld [vmem:[%s362 + $0x30] sm:$0xf]
        %v630 = vld [vmem:[%s362 + $0x34] sm:$0xf]
        %v631 = vld [vmem:[%s362 + $0x38] sm:$0xf]
        %v632 = vld [vmem:[%s362 + $0x3c] sm:$0xf]
        %v633 = vlaneseq
        %v634 = vshrl.u32 %v633, 7
        %v635 = vsub.s32 1, %v634
        %v636 = vrot.slane %v382, %v635
        %v653 = vunpack.c.l.b16 %v617
        %v654 = vunpack.c.l.b16 %v618
        %v655 = vunpack.c.l.b16 %v619
        %v656 = vunpack.c.l.b16 %v620
        %v657 = vunpack.c.l.b16 %v621
        %v658 = vunpack.c.l.b16 %v622
        %v659 = vunpack.c.l.b16 %v623
        %v660 = vunpack.c.l.b16 %v624
        %v661 = vunpack.c.l.b16 %v625
        %v662 = vunpack.c.l.b16 %v626
        %v663 = vunpack.c.l.b16 %v627
        %v664 = vunpack.c.l.b16 %v628
        %v665 = vunpack.c.l.b16 %v629
        %v666 = vunpack.c.l.b16 %v630
        %v667 = vunpack.c.l.b16 %v631
        %v668 = vunpack.c.l.b16 %v632
        %v669 = vpack.c.b16 %v654, %v653
        %v670 = vpack.c.b16 %v656, %v655
        %v671 = vpack.c.b16 %v658, %v657
        %v672 = vpack.c.b16 %v660, %v659
        %v673 = vpack.c.b16 %v662, %v661
        %v674 = vpack.c.b16 %v664, %v663
        %v675 = vpack.c.b16 %v666, %v665
        %v676 = vpack.c.b16 %v668, %v667
        %685 = vmatprep.subr.bf16.mxu0 0
        %686 = vmatpush1.bf16.msra.mxu0 %v669
        %687 = vmatprep.subr.bf16.mxu0 0
        %688 = vmatpush1.bf16.msra.mxu0 %v670
        %689 = vmatprep.subr.bf16.mxu0 0
        %690 = vmatpush1.bf16.msra.mxu0 %v671
        %691 = vmatprep.subr.bf16.mxu0 0
        %692 = vmatpush1.bf16.msra.mxu0 %v672
        %693 = vmatprep.subr.bf16.mxu0 0
        %694 = vmatpush1.bf16.msra.mxu0 %v673
        %695 = vmatprep.subr.bf16.mxu0 0
        %696 = vmatpush1.bf16.msra.mxu0 %v674
        %697 = vmatprep.subr.bf16.mxu0 0
        %698 = vmatpush1.bf16.msra.mxu0 %v675
        %699 = vmatprep.subr.bf16.mxu0 0
        %700 = vmatpush1.bf16.msra.mxu0 %v676
        %701 = vmatprep.subr.bf16.mxu0 0
        %702 = vmatpush1.bf16.msra.mxu0 0
        %703 = vmatprep.subr.bf16.mxu0 0
        %704 = vmatpush1.bf16.msra.mxu0 0
        %705 = vmatprep.subr.bf16.mxu0 0
        %706 = vmatpush1.bf16.msra.mxu0 0
        %707 = vmatprep.subr.bf16.mxu0 0
        %708 = vmatpush1.bf16.msra.mxu0 0
        %709 = vmatprep.subr.bf16.mxu0 0
        %710 = vmatpush1.bf16.msra.mxu0 0
        %711 = vmatprep.subr.bf16.mxu0 0
        %712 = vmatpush1.bf16.msra.mxu0 0
        %713 = vmatprep.subr.bf16.mxu0 0
        %714 = vmatpush1.bf16.msra.mxu0 0
        %715 = vmatprep.subr.bf16.mxu0 0
        %716 = vmatpush1.bf16.msra.mxu0 0
        %717 = vmatprep.mubr.bf16.mxu0 0
        %718 = vmatmul.mubr.bf16.gmra.mrb[0].mxu0 %v616
        %v719 = vpop.f32.mrb[0].mxu0
        %v720 = vadd.f32 %v636, %v719
        %v721 = vpop.f32.mrb[0].mxu0
        %v722 = vpop.f32.mrb[0].mxu0
        %v723 = vadd.f32 %v636, %v722
        %v724 = vpop.f32.mrb[0].mxu0
        %725 = vdwg.mxu0
        %v726 = vadd.f32 %v720, %v535
        %v727 = vadd.f32 %v723, %v536
        %v728 = vsel %vm384, %v726, 0.0
        %729 = vadd.xlane.f32.xlu0 %v728
        %v730 = vpop.xlane.xlu0 %729
        %v731 = vsel %vm384, %v727, 0.0
        %732 = vadd.xlane.f32.xlu0 %v731
        %v733 = vpop.xlane.xlu0 %732
        %v734 = vmul.f32 %v730, %v391
        %v735 = vmul.f32 %v733, %v391
        %v736 = vsub.f32 %v726, %v734
        %v737 = vsub.f32 %v727, %v735
        %v738 = vmul.f32 %v736, %v736
        %v739 = vmul.f32 %v737, %v737
        %v740 = vsel %vm384, %v738, 0.0
        %741 = vadd.xlane.f32.xlu0 %v740
        %v742 = vpop.xlane.xlu0 %741
        %v743 = vsel %vm384, %v739, 0.0
        %744 = vadd.xlane.f32.xlu0 %v743
        %v745 = vpop.xlane.xlu0 %744
        %v746 = vmul.f32 %v742, %v391
        %v747 = vmul.f32 %v745, %v391
        %v748 = vadd.f32 %v746, 1e-05
        %v749 = vadd.f32 %v747, 1e-05
        %v750 = vrsqrt.pop %v748
        %v751 = vrsqrt.pop %v749
        %v752 = vmul.f32 %v736, %v750
        %v753 = vmul.f32 %v737, %v751
        %v754 = vlaneseq
        %v755 = vshrl.u32 %v754, 7
        %v756 = vsub.s32 2, %v755
        %v757 = vrot.slane %v382, %v756
        %v758 = vmul.f32 %v752, %v757
        %v759 = vmul.f32 %v753, %v757
        %v760 = vlaneseq
        %v761 = vshrl.u32 %v760, 7
        %v762 = vsub.s32 3, %v761
        %v763 = vrot.slane %v382, %v762
        %v764 = vadd.f32 %v758, %v763
        %v765 = vadd.f32 %v759, %v763
        %v766 = vsel %vm384, %v764, 0.0
        %767 = vadd.xlane.f32.xlu0 %v766
        %v768 = vpop.xlane.xlu0 %767
        %v769 = vsel %vm384, %v765, 0.0
        %770 = vadd.xlane.f32.xlu0 %v769
        %v771 = vpop.xlane.xlu0 %770
        %v772 = vmul.f32 %v768, %v391
        %v773 = vmul.f32 %v771, %v391
        %v774 = vsub.f32 %v764, %v772
        %v775 = vsub.f32 %v765, %v773
        %v776 = vmul.f32 %v774, %v774
        %v777 = vmul.f32 %v775, %v775
        %v778 = vsel %vm384, %v776, 0.0
        %779 = vadd.xlane.f32.xlu0 %v778
        %v780 = vpop.xlane.xlu0 %779
        %v781 = vsel %vm384, %v777, 0.0
        %782 = vadd.xlane.f32.xlu0 %v781
        %v783 = vpop.xlane.xlu0 %782
        %v784 = vmul.f32 %v780, %v391
        %v785 = vmul.f32 %v783, %v391
        %v786 = vadd.f32 %v784, 1e-05
        %v787 = vadd.f32 %v785, 1e-05
        %v788 = vrsqrt.pop %v786
        %v789 = vrsqrt.pop %v787
        %v790 = vmul.f32 %v774, %v788
        %v791 = vmul.f32 %v775, %v789
        %v792 = vlaneseq
        %v793 = vshrl.u32 %v792, 7
        %v794 = vsub.s32 4, %v793
        %v795 = vrot.slane %v382, %v794
        %v796 = vmul.f32 %v790, %v795
        %v797 = vmul.f32 %v791, %v795
        %v798 = vlaneseq
        %v799 = vshrl.u32 %v798, 7
        %v800 = vsub.s32 5, %v799
        %v801 = vrot.slane %v382, %v800
        %v802 = vadd.f32 %v796, %v801
        %v803 = vadd.f32 %v797, %v801
        %804 = vst.msk [vmem:[#allocation2] sm:$0xff] %vm384, %v802
        %805 = vst.msk [vmem:[#allocation2 + $0x8] sm:$0xff] %vm384, %v803
        %p806 = scmp.eq.s32.totalorder %s23, 2
        // Predicated region
        $region49: #{decoder_forward.1} parent=43 // pred_check
          %p807 = pneg %p806
        $region50: #{decoder_forward.1} parent=43 // pred_check_branch
          %809 = sbr.rel (%p807) target = $region52
        $region51: #{decoder_forward.1} parent=43 // pred_region
          %v810 = vld [vmem:[#allocation2] sm:$0xff]
          %v811 = vld [vmem:[#allocation2 + $0x8] sm:$0xff]
          %812 = vst.msk [vmem:[#allocation3] sm:$0xff] %vm384, %v810
          %813 = vst.msk [vmem:[#allocation3 + $0x8] sm:$0xff] %vm384, %v811
        $region52: #{decoder_forward.1} parent=43 // pred_fallthru
          _
        // Predicated region
        $region53: #{decoder_forward.1} parent=43 // pred_check
          %p814 = pneg %p206
        $region54: #{decoder_forward.1} parent=43 // pred_check_branch
          %816 = sbr.rel (%p814) target = $region56
        $region55: #{decoder_forward.1} parent=43 // pred_region
          %s817 = smul.u32 2, %s22
          %s819 = ssub.s32 256, 256
          %820 = vsyncadd [#allocation4], %s819
          %s821 = smul.addr %s817, 128
          %s822 = scalar_lea.hbm %s6, %s821
          %s823 = sshll.u32 [#allocation3], 4
          %s824 = int_to_ptr.vmem [resolvable:$true] %s823
          %829 = dma.vmem_to_hbm [thread:$0]  %s824, 256, %s822, [#allocation4], 128, 128, 8
        $region56: #{decoder_forward.1} parent=43 // pred_fallthru
          _
        // Predicated region
        $region57: #{decoder_forward.1} parent=43 // pred_check
          %p830 = pneg %p206
        $region58: #{decoder_forward.1} parent=43 // pred_check_branch
          %832 = sbr.rel (%p830) target = $region60
        $region59: #{decoder_forward.1} parent=43 // pred_region
          %833 = dma.done [#allocation4], 256
        $region60: #{decoder_forward.1} parent=43 // pred_fallthru
          _
      $region44: #{decoder_forward.1} parent=5 // pred_fallthru
        _
      %p834 = scmp.le.s32.totalorder 2, %s13
      // Predicated region
      $region61: #{decoder_forward.1} parent=5 // pred_check
        %p835 = pneg %p834
      $region62: #{decoder_forward.1} parent=5 // pred_check_branch
        %837 = sbr.rel (%p835) target = $region64
      $region63: #{decoder_forward.1} parent=5 // pred_region
        %s838 = ssub.s32 %s13, 2
      $region64: #{decoder_forward.1} parent=5 // pred_fallthru
        _
    $region6: #{decoder_forward.1} parent=1 // loop_footer
      %s17 = sadd.s32 1, %s13
    $region7: #{decoder_forward.1} parent=1 // loop_footer_branch
      %12 = sbr.rel target = $region3
    $region8: #{decoder_forward.1} parent=1 // loop_exit
      _
    %839 = vsyncpa [#allocation4], 1
    %s840 = scalar_lea.sflag [#allocation4], 1
    %841 = vsyncpa %s840, 1

</llo_original>
